<compile_context>
chip_gen: v5e
topology: v5e:2x2
jax: 0.10.0
libtpu: 0.0.40
codegen_flags: <defaults>
</compile_context>

<pallas_src>
import functools

import jax
import jax.numpy as jnp
import numpy as np
from jax.experimental import pallas as pl
from jax.experimental.pallas import tpu as pltpu


# ------------------------------ fused kernel -------------------------------


def down_fused_kernel(x_ref, w1_ref, w2_ref, gb_ref, o_ref,
                      *, B, Hh, Wh, Cin, Cout, eps):
    # x_ref : (4, B*Hh, Wh*Cin) bf16 -- the four 2x2-pool taps, with (w, c)
    #         folded into the lane dim (layout change done by one XLA transpose
    #         in the wrapper).
    # w*_ref: (3, Wh*C_in, Wh*Cout) bf16 shifted-block-diagonal weights.
    # gb_ref: (4, Wh*Cout) f32 = [gamma1, beta1, gamma2, beta2], lane-tiled.
    # o_ref : (B*Hh, Wh*Cout) f32 lane-dense output slab.
    R = B * Hh
    n = B * Hh * Wh                        # BN reduces over (N, H, W)

    # ---------------- MaxPool2d(2): max over the 4 window taps -------------
    x = x_ref[...]                                        # (4, R, Wh*Cin)
    pooled = jnp.maximum(jnp.maximum(x[0], x[1]),
                         jnp.maximum(x[2], x[3]))         # (R, Wh*Cin) bf16

    # h position of every row (row = b*Hh + h); masks the padding=1 boundary
    # for the row-offset (oy) taps.
    h_pos = jax.lax.broadcasted_iota(jnp.int32, (R, 1), 0) % Hh

    def conv3x3(act, w_ref):
        """3x3 conv, padding=1: 3 accumulating MXU matmuls (implicit im2col).

        act: (R, Wh*C_in) bf16; w_ref: (3, Wh*C_in, Wh*Cout) bf16.
        The ox taps + column padding live in the weights; only row shifts and
        the h-boundary mask are done here.  Returns (R, Wh*Cout) f32.
        """
        L_in = act.shape[-1]
        zrow = jnp.zeros((1, L_in), act.dtype)
        acc = None
        for oy in (-1, 0, 1):
            if oy == -1:
                shifted = jnp.concatenate([zrow, act[:-1, :]], axis=0)
            elif oy == 0:
                shifted = act
            else:
                shifted = jnp.concatenate([act[1:, :], zrow], axis=0)
            valid = jnp.logical_and(h_pos + oy >= 0, h_pos + oy < Hh)
            masked = jnp.where(valid, shifted, jnp.zeros_like(shifted))
            part = jnp.dot(masked, w_ref[oy + 1],
                           preferred_element_type=jnp.float32)
            acc = part if acc is None else acc + part
        return acc

    def bn_relu(y, gamma_t, beta_t):
        """Batch-statistics BatchNorm + ReLU on the (R, Wh*Cout) folded layout."""
        def fold_w(v):          # (1, Wh*Cout) -> (1, Cout): sum the w groups
            s = v[:, 0:Cout]
            for w in range(1, Wh):
                s = s + v[:, w * Cout:(w + 1) * Cout]
            return s

        def tile_w(v):          # (1, Cout) -> (1, Wh*Cout)
            return jnp.concatenate([v] * Wh, axis=1)

        mean = fold_w(jnp.sum(y, axis=0, keepdims=True)) * (1.0 / n)
        yc = y - tile_w(mean)
        var = fold_w(jnp.sum(yc * yc, axis=0, keepdims=True)) * (1.0 / n)
        inv_t = tile_w(jax.lax.rsqrt(var + eps))
        return jnp.maximum(yc * inv_t * gamma_t + beta_t, 0.0)

    # ---------------- conv1 -> BN -> ReLU -----------------------------------
    a1 = bn_relu(conv3x3(pooled, w1_ref), gb_ref[0:1, :], gb_ref[1:2, :])
    # ---------------- conv2 -> BN -> ReLU  (same lane-folded layout) --------
    a2 = bn_relu(conv3x3(a1.astype(jnp.bfloat16), w2_ref),
                 gb_ref[2:3, :], gb_ref[3:4, :])
    o_ref[...] = a2


# ------------------------------- wrapper ------------------------------------


def _shifted_block_weights(w, Wh):
    """(3, 3, C_in, Cout) conv weights -> (3, Wh*C_in, Wh*Cout) matrices.

    mat[oy][w*C_in + ci, w'*Cout + co] = w[oy, (w - w') + 1, ci, co] when
    |w - w'| <= 1, else 0 -- i.e. the ox taps and the padding=1 column masking
    are folded into the weight so the kernel needs one matmul per oy.
    """
    Cin, Cout = int(w.shape[2]), int(w.shape[3])
    ox = np.arange(3)[:, None, None] - 1
    ws = np.arange(Wh)[None, :, None]
    wp = np.arange(Wh)[None, None, :]
    ind = jnp.asarray((ws == wp + ox).astype(np.float32))       # (3, Wh, Wh)
    m = jnp.einsum("xsw,yxio->ysiwo", ind, w)                   # (3,Wh,Cin,Wh,Cout)
    return m.reshape(3, Wh * Cin, Wh * Cout)


def down_forward(x_nchw, params):
    """Equivalent of Down(in_ch, out_ch).forward(x) for NCHW float32 input."""
    B, Cin, H, W = x_nchw.shape
    Hh, Wh = H // 2, W // 2
    Cout = params["w1"].shape[-1]
    R, Lin, Lmid = B * Hh, Wh * Cin, Wh * Cout

    # NCHW -> (pool tap, b*Hh + h, w*Cin + c): one XLA transpose fusing the
    # layout change (width & channels folded into lanes) with the 2x2-window
    # rearrangement.  bf16 = native MXU operand dtype on v5e/v6e/v7x.
    xw = (x_nchw.reshape(B, Cin, Hh, 2, Wh, 2)
                .transpose(3, 5, 0, 2, 4, 1)
                .reshape(4, R, Lin)
                .astype(jnp.bfloat16))

    w1r = _shifted_block_weights(params["w1"], Wh).astype(jnp.bfloat16)
    w2r = _shifted_block_weights(params["w2"], Wh).astype(jnp.bfloat16)

    # gamma/beta of both BN layers, lane-tiled across w, packed into ONE input.
    def lane_tiled(v):
        return jnp.tile(v.reshape(1, Cout), (1, Wh))
    gb = jnp.concatenate(
        [lane_tiled(params["gamma1"]), lane_tiled(params["beta1"]),
         lane_tiled(params["gamma2"]), lane_tiled(params["beta2"])],
        axis=0).astype(jnp.float32)                              # (4, Wh*Cout)

    kern = functools.partial(down_fused_kernel, B=B, Hh=Hh, Wh=Wh,
                             Cin=Cin, Cout=Cout, eps=1e-5)

    flops = (2 * 3 * R * Lin * Lmid        # conv1 (3 matmuls)
             + 2 * 3 * R * Lmid * Lmid     # conv2 (3 matmuls)
             + 3 * R * Lin                 # maxpool
             + 20 * R * Lmid)              # BN/ReLU elementwise
    bytes_accessed = (2 * (4 * R * Lin + 3 * Lin * Lmid + 3 * Lmid * Lmid)
                      + 4 * (4 * Lmid + R * Lmid))

    out2d = pl.pallas_call(
        kern,
        out_shape=jax.ShapeDtypeStruct((R, Lmid), jnp.float32),
        grid=(1,),
        in_specs=[
            pl.BlockSpec((4, R, Lin), lambda i: (0, 0, 0)),
            pl.BlockSpec((3, Lin, Lmid), lambda i: (0, 0, 0)),
            pl.BlockSpec((3, Lmid, Lmid), lambda i: (0, 0, 0)),
            pl.BlockSpec((4, Lmid), lambda i: (0, 0)),
        ],
        out_specs=pl.BlockSpec((R, Lmid), lambda i: (0, 0)),
        compiler_params=pltpu.CompilerParams(
            dimension_semantics=("arbitrary",),
            vmem_limit_bytes=32 * 1024 * 1024),
        cost_estimate=pl.CostEstimate(
            flops=int(flops), transcendentals=2 * Cout,
            bytes_accessed=int(bytes_accessed)),
    )(xw, w1r, w2r, gb)

    # (b*Hh+h, w*Cout+c) lane-dense slab -> NHWC -> NCHW (PyTorch interface).
    return out2d.reshape(B, Hh, Wh, Cout).transpose(0, 3, 1, 2)


def init_params(in_channels, out_channels, key):
    k1, k2 = jax.random.split(key, 2)
    # Conv biases are intentionally omitted: a per-channel bias added right
    # before batch-statistics BatchNorm is exactly cancelled by the mean
    # subtraction, so the forward output is identical (bias=False pattern).
    return {
        # conv weights stored as (kh, kw, Cin, Cout); PyTorch layout would be
        # (Cout, Cin, kh, kw) -- purely a storage convention here.
        "w1": jax.random.normal(k1, (3, 3, in_channels, out_channels),
                                jnp.float32) * 0.1,
        "gamma1": jnp.ones((out_channels,), jnp.float32),
        "beta1": jnp.zeros((out_channels,), jnp.float32),
        "w2": jax.random.normal(k2, (3, 3, out_channels, out_channels),
                                jnp.float32) * 0.1,
        "gamma2": jnp.ones((out_channels,), jnp.float32),
        "beta2": jnp.zeros((out_channels,), jnp.float32),
    }


if __name__ == "__main__":
    B, Cin, Cout, HW = 2, 4, 8, 16
    key = jax.random.PRNGKey(0)
    kp, kx = jax.random.split(key)
    params = init_params(Cin, Cout, kp)
    x = jax.random.normal(kx, (B, Cin, HW, HW), jnp.float32)  # NCHW like torch

    out = jax.jit(down_forward)(x, params)
    out = jax.block_until_ready(out)

    assert out.shape == (B, Cout, HW // 2, HW // 2), out.shape
    assert out.dtype == jnp.float32
    assert bool(jnp.all(jnp.isfinite(out)))
    assert bool(jnp.all(out >= 0.0))       # final op is ReLU
    print("KERNEL_OK")
</pallas_src>

<mosaic_0001>
module attributes {stable_mosaic.version = 11 : i64} {
  func.func @down_fused_kernel(%arg0: i32, %arg1: memref<4x16x32xbf16, #tpu.memory_space<vmem>>, %arg2: memref<3x32x64xbf16, #tpu.memory_space<vmem>>, %arg3: memref<3x64x64xbf16, #tpu.memory_space<vmem>>, %arg4: memref<4x64xf32, #tpu.memory_space<vmem>>, %arg5: memref<16x64xf32, #tpu.memory_space<vmem>>) attributes {dimension_semantics = [#tpu.dimension_semantics<arbitrary>], iteration_bounds = array<i64: 1>, scalar_prefetch = 0 : i64, scratch_operands = 0 : i64, tpu.core_type = #tpu.core_type<tc>, window_params = [{pipeline_mode = #tpu.pipeline_mode<synchronous>, transform_indices = @transform_0, window_bounds = array<i64: 4, 16, 32>}, {pipeline_mode = #tpu.pipeline_mode<synchronous>, transform_indices = @transform_1, window_bounds = array<i64: 3, 32, 64>}, {pipeline_mode = #tpu.pipeline_mode<synchronous>, transform_indices = @transform_2, window_bounds = array<i64: 3, 64, 64>}, {pipeline_mode = #tpu.pipeline_mode<synchronous>, transform_indices = @transform_3, window_bounds = array<i64: 4, 64>}, {pipeline_mode = #tpu.pipeline_mode<synchronous>, transform_indices = @transform_4, window_bounds = array<i64: 16, 64>}]} {
    %c0 = arith.constant 0 : index
    %c0_0 = arith.constant 0 : index
    %c0_1 = arith.constant 0 : index
    %0 = vector.load %arg1[%c0, %c0_0, %c0_1] : memref<4x16x32xbf16, #tpu.memory_space<vmem>>, vector<4x16x32xbf16>
    %1 = vector.extract_strided_slice %0 {offsets = [0, 0, 0], sizes = [1, 16, 32], strides = [1, 1, 1]} : vector<4x16x32xbf16> to vector<1x16x32xbf16>
    %2 = vector.shape_cast %1 : vector<1x16x32xbf16> to vector<16x32xbf16>
    %3 = vector.extract_strided_slice %0 {offsets = [1, 0, 0], sizes = [1, 16, 32], strides = [1, 1, 1]} : vector<4x16x32xbf16> to vector<1x16x32xbf16>
    %4 = vector.shape_cast %3 : vector<1x16x32xbf16> to vector<16x32xbf16>
    %5 = arith.maximumf %2, %4 : vector<16x32xbf16>
    %6 = vector.extract_strided_slice %0 {offsets = [2, 0, 0], sizes = [1, 16, 32], strides = [1, 1, 1]} : vector<4x16x32xbf16> to vector<1x16x32xbf16>
    %7 = vector.shape_cast %6 : vector<1x16x32xbf16> to vector<16x32xbf16>
    %8 = vector.extract_strided_slice %0 {offsets = [3, 0, 0], sizes = [1, 16, 32], strides = [1, 1, 1]} : vector<4x16x32xbf16> to vector<1x16x32xbf16>
    %9 = vector.shape_cast %8 : vector<1x16x32xbf16> to vector<16x32xbf16>
    %10 = arith.maximumf %7, %9 : vector<16x32xbf16>
    %11 = arith.maximumf %5, %10 : vector<16x32xbf16>
    %12 = tpu.iota {dimensions = array<i32: 0>} : vector<16x1xi32>
    %c8_i32 = arith.constant 8 : i32
    %c0_i32 = arith.constant 0 : i32
    %13 = arith.cmpi eq, %c8_i32, %c0_i32 : i32
    %c1_i32 = arith.constant 1 : i32
    %14 = arith.select %13, %c1_i32, %c8_i32 : i32
    %15 = vector.broadcast %14 : i32 to vector<16x1xi32>
    %16 = arith.remsi %12, %15 : vector<16x1xi32>
    %c0_i32_2 = arith.constant 0 : i32
    %17 = vector.broadcast %c0_i32_2 : i32 to vector<16x1xi32>
    %18 = arith.cmpi ne, %16, %17 : vector<16x1xi32>
    %c0_i32_3 = arith.constant 0 : i32
    %19 = vector.broadcast %c0_i32_3 : i32 to vector<16x1xi32>
    %20 = arith.cmpi slt, %16, %19 : vector<16x1xi32>
    %c0_i32_4 = arith.constant 0 : i32
    %21 = arith.cmpi slt, %14, %c0_i32_4 : i32
    %22 = vector.broadcast %21 : i1 to vector<16x1xi1>
    %23 = vector.broadcast %22 : vector<16x1xi1> to vector<16x1xi1>
    %24 = arith.xori %20, %23 : vector<16x1xi1>
    %25 = arith.andi %24, %18 : vector<16x1xi1>
    %26 = vector.broadcast %14 : i32 to vector<16x1xi32>
    %27 = arith.addi %16, %26 : vector<16x1xi32>
    %28 = arith.select %25, %27, %16 : vector<16x1xi1>, vector<16x1xi32>
    %cst = arith.constant 0.000000e+00 : bf16
    %29 = vector.broadcast %cst : bf16 to vector<1x32xbf16>
    %30 = vector.extract_strided_slice %11 {offsets = [0, 0], sizes = [15, 32], strides = [1, 1]} : vector<16x32xbf16> to vector<15x32xbf16>
    %31 = tpu.concatenate %29, %30 in 0 : vector<1x32xbf16>, vector<15x32xbf16> -> vector<16x32xbf16>
    %c-1_i32 = arith.constant -1 : i32
    %32 = vector.broadcast %c-1_i32 : i32 to vector<16x1xi32>
    %33 = arith.addi %28, %32 : vector<16x1xi32>
    %c0_i32_5 = arith.constant 0 : i32
    %34 = vector.broadcast %c0_i32_5 : i32 to vector<16x1xi32>
    %35 = arith.cmpi sge, %33, %34 : vector<16x1xi32>
    %c-1_i32_6 = arith.constant -1 : i32
    %36 = vector.broadcast %c-1_i32_6 : i32 to vector<16x1xi32>
    %37 = arith.addi %28, %36 : vector<16x1xi32>
    %c8_i32_7 = arith.constant 8 : i32
    %38 = vector.broadcast %c8_i32_7 : i32 to vector<16x1xi32>
    %39 = arith.cmpi slt, %37, %38 : vector<16x1xi32>
    %40 = arith.andi %35, %39 : vector<16x1xi1>
    %cst_8 = arith.constant 0.000000e+00 : bf16
    %41 = vector.broadcast %cst_8 : bf16 to vector<16x32xbf16>
    %42 = vector.shape_cast %40 : vector<16x1xi1> to vector<16x1xi1>
    %43 = vector.broadcast %42 : vector<16x1xi1> to vector<16x32xi1>
    %44 = arith.select %43, %31, %41 : vector<16x32xi1>, vector<16x32xbf16>
    %c0_9 = arith.constant 0 : index
    %c0_10 = arith.constant 0 : index
    %c0_11 = arith.constant 0 : index
    %45 = vector.load %arg2[%c0_9, %c0_10, %c0_11] : memref<3x32x64xbf16, #tpu.memory_space<vmem>>, vector<1x32x64xbf16>
    %46 = vector.shape_cast %45 : vector<1x32x64xbf16> to vector<32x64xbf16>
    %cst_12 = arith.constant dense<0.000000e+00> : vector<16x64xf32>
    %47 = tpu.matmul %44, %46, %cst_12 {dimension_numbers = #tpu.dot_dimension_numbers<[1], [0], [0], [1], [0, 0, 1, 1], [], []>} : vector<16x32xbf16>, vector<32x64xbf16>, vector<16x64xf32> -> vector<16x64xf32>
    %c0_i32_13 = arith.constant 0 : i32
    %48 = vector.broadcast %c0_i32_13 : i32 to vector<16x1xi32>
    %49 = arith.addi %28, %48 : vector<16x1xi32>
    %c0_i32_14 = arith.constant 0 : i32
    %50 = vector.broadcast %c0_i32_14 : i32 to vector<16x1xi32>
    %51 = arith.cmpi sge, %49, %50 : vector<16x1xi32>
    %c0_i32_15 = arith.constant 0 : i32
    %52 = vector.broadcast %c0_i32_15 : i32 to vector<16x1xi32>
    %53 = arith.addi %28, %52 : vector<16x1xi32>
    %c8_i32_16 = arith.constant 8 : i32
    %54 = vector.broadcast %c8_i32_16 : i32 to vector<16x1xi32>
    %55 = arith.cmpi slt, %53, %54 : vector<16x1xi32>
    %56 = arith.andi %51, %55 : vector<16x1xi1>
    %cst_17 = arith.constant 0.000000e+00 : bf16
    %57 = vector.broadcast %cst_17 : bf16 to vector<16x32xbf16>
    %58 = vector.shape_cast %56 : vector<16x1xi1> to vector<16x1xi1>
    %59 = vector.broadcast %58 : vector<16x1xi1> to vector<16x32xi1>
    %60 = arith.select %59, %11, %57 : vector<16x32xi1>, vector<16x32xbf16>
    %c1 = arith.constant 1 : index
    %c0_18 = arith.constant 0 : index
    %c0_19 = arith.constant 0 : index
    %61 = vector.load %arg2[%c1, %c0_18, %c0_19] : memref<3x32x64xbf16, #tpu.memory_space<vmem>>, vector<1x32x64xbf16>
    %62 = vector.shape_cast %61 : vector<1x32x64xbf16> to vector<32x64xbf16>
    %cst_20 = arith.constant dense<0.000000e+00> : vector<16x64xf32>
    %63 = tpu.matmul %60, %62, %cst_20 {dimension_numbers = #tpu.dot_dimension_numbers<[1], [0], [0], [1], [0, 0, 1, 1], [], []>} : vector<16x32xbf16>, vector<32x64xbf16>, vector<16x64xf32> -> vector<16x64xf32>
    %64 = arith.addf %47, %63 : vector<16x64xf32>
    %65 = vector.extract_strided_slice %11 {offsets = [1, 0], sizes = [15, 32], strides = [1, 1]} : vector<16x32xbf16> to vector<15x32xbf16>
    %66 = tpu.concatenate %65, %29 in 0 : vector<15x32xbf16>, vector<1x32xbf16> -> vector<16x32xbf16>
    %c1_i32_21 = arith.constant 1 : i32
    %67 = vector.broadcast %c1_i32_21 : i32 to vector<16x1xi32>
    %68 = arith.addi %28, %67 : vector<16x1xi32>
    %c0_i32_22 = arith.constant 0 : i32
    %69 = vector.broadcast %c0_i32_22 : i32 to vector<16x1xi32>
    %70 = arith.cmpi sge, %68, %69 : vector<16x1xi32>
    %c1_i32_23 = arith.constant 1 : i32
    %71 = vector.broadcast %c1_i32_23 : i32 to vector<16x1xi32>
    %72 = arith.addi %28, %71 : vector<16x1xi32>
    %c8_i32_24 = arith.constant 8 : i32
    %73 = vector.broadcast %c8_i32_24 : i32 to vector<16x1xi32>
    %74 = arith.cmpi slt, %72, %73 : vector<16x1xi32>
    %75 = arith.andi %70, %74 : vector<16x1xi1>
    %cst_25 = arith.constant 0.000000e+00 : bf16
    %76 = vector.broadcast %cst_25 : bf16 to vector<16x32xbf16>
    %77 = vector.shape_cast %75 : vector<16x1xi1> to vector<16x1xi1>
    %78 = vector.broadcast %77 : vector<16x1xi1> to vector<16x32xi1>
    %79 = arith.select %78, %66, %76 : vector<16x32xi1>, vector<16x32xbf16>
    %c2 = arith.constant 2 : index
    %c0_26 = arith.constant 0 : index
    %c0_27 = arith.constant 0 : index
    %80 = vector.load %arg2[%c2, %c0_26, %c0_27] : memref<3x32x64xbf16, #tpu.memory_space<vmem>>, vector<1x32x64xbf16>
    %81 = vector.shape_cast %80 : vector<1x32x64xbf16> to vector<32x64xbf16>
    %cst_28 = arith.constant dense<0.000000e+00> : vector<16x64xf32>
    %82 = tpu.matmul %79, %81, %cst_28 {dimension_numbers = #tpu.dot_dimension_numbers<[1], [0], [0], [1], [0, 0, 1, 1], [], []>} : vector<16x32xbf16>, vector<32x64xbf16>, vector<16x64xf32> -> vector<16x64xf32>
    %83 = arith.addf %64, %82 : vector<16x64xf32>
    %c0_29 = arith.constant 0 : index
    %c0_30 = arith.constant 0 : index
    %84 = vector.load %arg4[%c0_29, %c0_30] : memref<4x64xf32, #tpu.memory_space<vmem>>, vector<1x64xf32>
    %c1_31 = arith.constant 1 : index
    %c0_32 = arith.constant 0 : index
    %85 = vector.load %arg4[%c1_31, %c0_32] : memref<4x64xf32, #tpu.memory_space<vmem>>, vector<1x64xf32>
    %cst_33 = arith.constant dense<0.000000e+00> : vector<64xf32>
    %86 = vector.multi_reduction <add>, %83, %cst_33 [0] : vector<16x64xf32> to vector<64xf32>
    %87 = vector.shape_cast %86 : vector<64xf32> to vector<1x64xf32>
    %88 = vector.extract_strided_slice %87 {offsets = [0, 0], sizes = [1, 8], strides = [1, 1]} : vector<1x64xf32> to vector<1x8xf32>
    %89 = vector.extract_strided_slice %87 {offsets = [0, 8], sizes = [1, 8], strides = [1, 1]} : vector<1x64xf32> to vector<1x8xf32>
    %90 = arith.addf %88, %89 : vector<1x8xf32>
    %91 = vector.extract_strided_slice %87 {offsets = [0, 16], sizes = [1, 8], strides = [1, 1]} : vector<1x64xf32> to vector<1x8xf32>
    %92 = arith.addf %90, %91 : vector<1x8xf32>
    %93 = vector.extract_strided_slice %87 {offsets = [0, 24], sizes = [1, 8], strides = [1, 1]} : vector<1x64xf32> to vector<1x8xf32>
    %94 = arith.addf %92, %93 : vector<1x8xf32>
    %95 = vector.extract_strided_slice %87 {offsets = [0, 32], sizes = [1, 8], strides = [1, 1]} : vector<1x64xf32> to vector<1x8xf32>
    %96 = arith.addf %94, %95 : vector<1x8xf32>
    %97 = vector.extract_strided_slice %87 {offsets = [0, 40], sizes = [1, 8], strides = [1, 1]} : vector<1x64xf32> to vector<1x8xf32>
    %98 = arith.addf %96, %97 : vector<1x8xf32>
    %99 = vector.extract_strided_slice %87 {offsets = [0, 48], sizes = [1, 8], strides = [1, 1]} : vector<1x64xf32> to vector<1x8xf32>
    %100 = arith.addf %98, %99 : vector<1x8xf32>
    %101 = vector.extract_strided_slice %87 {offsets = [0, 56], sizes = [1, 8], strides = [1, 1]} : vector<1x64xf32> to vector<1x8xf32>
    %102 = arith.addf %100, %101 : vector<1x8xf32>
    %cst_34 = arith.constant 7.812500e-03 : f32
    %103 = vector.broadcast %cst_34 : f32 to vector<1x8xf32>
    %104 = arith.mulf %102, %103 : vector<1x8xf32>
    %105 = tpu.concatenate %104, %104, %104, %104, %104, %104, %104, %104 in 1 : vector<1x8xf32>, vector<1x8xf32>, vector<1x8xf32>, vector<1x8xf32>, vector<1x8xf32>, vector<1x8xf32>, vector<1x8xf32>, vector<1x8xf32> -> vector<1x64xf32>
    %106 = vector.broadcast %105 : vector<1x64xf32> to vector<16x64xf32>
    %107 = arith.subf %83, %106 : vector<16x64xf32>
    %108 = arith.mulf %107, %107 : vector<16x64xf32>
    %cst_35 = arith.constant dense<0.000000e+00> : vector<64xf32>
    %109 = vector.multi_reduction <add>, %108, %cst_35 [0] : vector<16x64xf32> to vector<64xf32>
    %110 = vector.shape_cast %109 : vector<64xf32> to vector<1x64xf32>
    %111 = vector.extract_strided_slice %110 {offsets = [0, 0], sizes = [1, 8], strides = [1, 1]} : vector<1x64xf32> to vector<1x8xf32>
    %112 = vector.extract_strided_slice %110 {offsets = [0, 8], sizes = [1, 8], strides = [1, 1]} : vector<1x64xf32> to vector<1x8xf32>
    %113 = arith.addf %111, %112 : vector<1x8xf32>
    %114 = vector.extract_strided_slice %110 {offsets = [0, 16], sizes = [1, 8], strides = [1, 1]} : vector<1x64xf32> to vector<1x8xf32>
    %115 = arith.addf %113, %114 : vector<1x8xf32>
    %116 = vector.extract_strided_slice %110 {offsets = [0, 24], sizes = [1, 8], strides = [1, 1]} : vector<1x64xf32> to vector<1x8xf32>
    %117 = arith.addf %115, %116 : vector<1x8xf32>
    %118 = vector.extract_strided_slice %110 {offsets = [0, 32], sizes = [1, 8], strides = [1, 1]} : vector<1x64xf32> to vector<1x8xf32>
    %119 = arith.addf %117, %118 : vector<1x8xf32>
    %120 = vector.extract_strided_slice %110 {offsets = [0, 40], sizes = [1, 8], strides = [1, 1]} : vector<1x64xf32> to vector<1x8xf32>
    %121 = arith.addf %119, %120 : vector<1x8xf32>
    %122 = vector.extract_strided_slice %110 {offsets = [0, 48], sizes = [1, 8], strides = [1, 1]} : vector<1x64xf32> to vector<1x8xf32>
    %123 = arith.addf %121, %122 : vector<1x8xf32>
    %124 = vector.extract_strided_slice %110 {offsets = [0, 56], sizes = [1, 8], strides = [1, 1]} : vector<1x64xf32> to vector<1x8xf32>
    %125 = arith.addf %123, %124 : vector<1x8xf32>
    %cst_36 = arith.constant 7.812500e-03 : f32
    %126 = vector.broadcast %cst_36 : f32 to vector<1x8xf32>
    %127 = arith.mulf %125, %126 : vector<1x8xf32>
    %cst_37 = arith.constant 9.99999974E-6 : f32
    %128 = vector.broadcast %cst_37 : f32 to vector<1x8xf32>
    %129 = arith.addf %127, %128 : vector<1x8xf32>
    %130 = math.rsqrt %129 : vector<1x8xf32>
    %131 = tpu.concatenate %130, %130, %130, %130, %130, %130, %130, %130 in 1 : vector<1x8xf32>, vector<1x8xf32>, vector<1x8xf32>, vector<1x8xf32>, vector<1x8xf32>, vector<1x8xf32>, vector<1x8xf32>, vector<1x8xf32> -> vector<1x64xf32>
    %132 = vector.broadcast %131 : vector<1x64xf32> to vector<16x64xf32>
    %133 = arith.mulf %107, %132 : vector<16x64xf32>
    %134 = vector.broadcast %84 : vector<1x64xf32> to vector<16x64xf32>
    %135 = arith.mulf %133, %134 : vector<16x64xf32>
    %136 = vector.broadcast %85 : vector<1x64xf32> to vector<16x64xf32>
    %137 = arith.addf %135, %136 : vector<16x64xf32>
    %cst_38 = arith.constant 0.000000e+00 : f32
    %138 = vector.broadcast %cst_38 : f32 to vector<16x64xf32>
    %139 = arith.maximumf %137, %138 : vector<16x64xf32>
    %140 = arith.truncf %139 : vector<16x64xf32> to vector<16x64xbf16>
    %cst_39 = arith.constant 0.000000e+00 : bf16
    %141 = vector.broadcast %cst_39 : bf16 to vector<1x64xbf16>
    %142 = vector.extract_strided_slice %140 {offsets = [0, 0], sizes = [15, 64], strides = [1, 1]} : vector<16x64xbf16> to vector<15x64xbf16>
    %143 = tpu.concatenate %141, %142 in 0 : vector<1x64xbf16>, vector<15x64xbf16> -> vector<16x64xbf16>
    %c-1_i32_40 = arith.constant -1 : i32
    %144 = vector.broadcast %c-1_i32_40 : i32 to vector<16x1xi32>
    %145 = arith.addi %28, %144 : vector<16x1xi32>
    %c0_i32_41 = arith.constant 0 : i32
    %146 = vector.broadcast %c0_i32_41 : i32 to vector<16x1xi32>
    %147 = arith.cmpi sge, %145, %146 : vector<16x1xi32>
    %c-1_i32_42 = arith.constant -1 : i32
    %148 = vector.broadcast %c-1_i32_42 : i32 to vector<16x1xi32>
    %149 = arith.addi %28, %148 : vector<16x1xi32>
    %c8_i32_43 = arith.constant 8 : i32
    %150 = vector.broadcast %c8_i32_43 : i32 to vector<16x1xi32>
    %151 = arith.cmpi slt, %149, %150 : vector<16x1xi32>
    %152 = arith.andi %147, %151 : vector<16x1xi1>
    %cst_44 = arith.constant 0.000000e+00 : bf16
    %153 = vector.broadcast %cst_44 : bf16 to vector<16x64xbf16>
    %154 = vector.shape_cast %152 : vector<16x1xi1> to vector<16x1xi1>
    %155 = vector.broadcast %154 : vector<16x1xi1> to vector<16x64xi1>
    %156 = arith.select %155, %143, %153 : vector<16x64xi1>, vector<16x64xbf16>
    %c0_45 = arith.constant 0 : index
    %c0_46 = arith.constant 0 : index
    %c0_47 = arith.constant 0 : index
    %157 = vector.load %arg3[%c0_45, %c0_46, %c0_47] : memref<3x64x64xbf16, #tpu.memory_space<vmem>>, vector<1x64x64xbf16>
    %158 = vector.shape_cast %157 : vector<1x64x64xbf16> to vector<64x64xbf16>
    %cst_48 = arith.constant dense<0.000000e+00> : vector<16x64xf32>
    %159 = tpu.matmul %156, %158, %cst_48 {dimension_numbers = #tpu.dot_dimension_numbers<[1], [0], [0], [1], [0, 0, 1, 1], [], []>} : vector<16x64xbf16>, vector<64x64xbf16>, vector<16x64xf32> -> vector<16x64xf32>
    %c0_i32_49 = arith.constant 0 : i32
    %160 = vector.broadcast %c0_i32_49 : i32 to vector<16x1xi32>
    %161 = arith.addi %28, %160 : vector<16x1xi32>
    %c0_i32_50 = arith.constant 0 : i32
    %162 = vector.broadcast %c0_i32_50 : i32 to vector<16x1xi32>
    %163 = arith.cmpi sge, %161, %162 : vector<16x1xi32>
    %c0_i32_51 = arith.constant 0 : i32
    %164 = vector.broadcast %c0_i32_51 : i32 to vector<16x1xi32>
    %165 = arith.addi %28, %164 : vector<16x1xi32>
    %c8_i32_52 = arith.constant 8 : i32
    %166 = vector.broadcast %c8_i32_52 : i32 to vector<16x1xi32>
    %167 = arith.cmpi slt, %165, %166 : vector<16x1xi32>
    %168 = arith.andi %163, %167 : vector<16x1xi1>
    %cst_53 = arith.constant 0.000000e+00 : bf16
    %169 = vector.broadcast %cst_53 : bf16 to vector<16x64xbf16>
    %170 = vector.shape_cast %168 : vector<16x1xi1> to vector<16x1xi1>
    %171 = vector.broadcast %170 : vector<16x1xi1> to vector<16x64xi1>
    %172 = arith.select %171, %140, %169 : vector<16x64xi1>, vector<16x64xbf16>
    %c1_54 = arith.constant 1 : index
    %c0_55 = arith.constant 0 : index
    %c0_56 = arith.constant 0 : index
    %173 = vector.load %arg3[%c1_54, %c0_55, %c0_56] : memref<3x64x64xbf16, #tpu.memory_space<vmem>>, vector<1x64x64xbf16>
    %174 = vector.shape_cast %173 : vector<1x64x64xbf16> to vector<64x64xbf16>
    %cst_57 = arith.constant dense<0.000000e+00> : vector<16x64xf32>
    %175 = tpu.matmul %172, %174, %cst_57 {dimension_numbers = #tpu.dot_dimension_numbers<[1], [0], [0], [1], [0, 0, 1, 1], [], []>} : vector<16x64xbf16>, vector<64x64xbf16>, vector<16x64xf32> -> vector<16x64xf32>
    %176 = arith.addf %159, %175 : vector<16x64xf32>
    %177 = vector.extract_strided_slice %140 {offsets = [1, 0], sizes = [15, 64], strides = [1, 1]} : vector<16x64xbf16> to vector<15x64xbf16>
    %178 = tpu.concatenate %177, %141 in 0 : vector<15x64xbf16>, vector<1x64xbf16> -> vector<16x64xbf16>
    %c1_i32_58 = arith.constant 1 : i32
    %179 = vector.broadcast %c1_i32_58 : i32 to vector<16x1xi32>
    %180 = arith.addi %28, %179 : vector<16x1xi32>
    %c0_i32_59 = arith.constant 0 : i32
    %181 = vector.broadcast %c0_i32_59 : i32 to vector<16x1xi32>
    %182 = arith.cmpi sge, %180, %181 : vector<16x1xi32>
    %c1_i32_60 = arith.constant 1 : i32
    %183 = vector.broadcast %c1_i32_60 : i32 to vector<16x1xi32>
    %184 = arith.addi %28, %183 : vector<16x1xi32>
    %c8_i32_61 = arith.constant 8 : i32
    %185 = vector.broadcast %c8_i32_61 : i32 to vector<16x1xi32>
    %186 = arith.cmpi slt, %184, %185 : vector<16x1xi32>
    %187 = arith.andi %182, %186 : vector<16x1xi1>
    %cst_62 = arith.constant 0.000000e+00 : bf16
    %188 = vector.broadcast %cst_62 : bf16 to vector<16x64xbf16>
    %189 = vector.shape_cast %187 : vector<16x1xi1> to vector<16x1xi1>
    %190 = vector.broadcast %189 : vector<16x1xi1> to vector<16x64xi1>
    %191 = arith.select %190, %178, %188 : vector<16x64xi1>, vector<16x64xbf16>
    %c2_63 = arith.constant 2 : index
    %c0_64 = arith.constant 0 : index
    %c0_65 = arith.constant 0 : index
    %192 = vector.load %arg3[%c2_63, %c0_64, %c0_65] : memref<3x64x64xbf16, #tpu.memory_space<vmem>>, vector<1x64x64xbf16>
    %193 = vector.shape_cast %192 : vector<1x64x64xbf16> to vector<64x64xbf16>
    %cst_66 = arith.constant dense<0.000000e+00> : vector<16x64xf32>
    %194 = tpu.matmul %191, %193, %cst_66 {dimension_numbers = #tpu.dot_dimension_numbers<[1], [0], [0], [1], [0, 0, 1, 1], [], []>} : vector<16x64xbf16>, vector<64x64xbf16>, vector<16x64xf32> -> vector<16x64xf32>
    %195 = arith.addf %176, %194 : vector<16x64xf32>
    %c2_67 = arith.constant 2 : index
    %c0_68 = arith.constant 0 : index
    %196 = vector.load %arg4[%c2_67, %c0_68] : memref<4x64xf32, #tpu.memory_space<vmem>>, vector<1x64xf32>
    %c3 = arith.constant 3 : index
    %c0_69 = arith.constant 0 : index
    %197 = vector.load %arg4[%c3, %c0_69] : memref<4x64xf32, #tpu.memory_space<vmem>>, vector<1x64xf32>
    %cst_70 = arith.constant dense<0.000000e+00> : vector<64xf32>
    %198 = vector.multi_reduction <add>, %195, %cst_70 [0] : vector<16x64xf32> to vector<64xf32>
    %199 = vector.shape_cast %198 : vector<64xf32> to vector<1x64xf32>
    %200 = vector.extract_strided_slice %199 {offsets = [0, 0], sizes = [1, 8], strides = [1, 1]} : vector<1x64xf32> to vector<1x8xf32>
    %201 = vector.extract_strided_slice %199 {offsets = [0, 8], sizes = [1, 8], strides = [1, 1]} : vector<1x64xf32> to vector<1x8xf32>
    %202 = arith.addf %200, %201 : vector<1x8xf32>
    %203 = vector.extract_strided_slice %199 {offsets = [0, 16], sizes = [1, 8], strides = [1, 1]} : vector<1x64xf32> to vector<1x8xf32>
    %204 = arith.addf %202, %203 : vector<1x8xf32>
    %205 = vector.extract_strided_slice %199 {offsets = [0, 24], sizes = [1, 8], strides = [1, 1]} : vector<1x64xf32> to vector<1x8xf32>
    %206 = arith.addf %204, %205 : vector<1x8xf32>
    %207 = vector.extract_strided_slice %199 {offsets = [0, 32], sizes = [1, 8], strides = [1, 1]} : vector<1x64xf32> to vector<1x8xf32>
    %208 = arith.addf %206, %207 : vector<1x8xf32>
    %209 = vector.extract_strided_slice %199 {offsets = [0, 40], sizes = [1, 8], strides = [1, 1]} : vector<1x64xf32> to vector<1x8xf32>
    %210 = arith.addf %208, %209 : vector<1x8xf32>
    %211 = vector.extract_strided_slice %199 {offsets = [0, 48], sizes = [1, 8], strides = [1, 1]} : vector<1x64xf32> to vector<1x8xf32>
    %212 = arith.addf %210, %211 : vector<1x8xf32>
    %213 = vector.extract_strided_slice %199 {offsets = [0, 56], sizes = [1, 8], strides = [1, 1]} : vector<1x64xf32> to vector<1x8xf32>
    %214 = arith.addf %212, %213 : vector<1x8xf32>
    %cst_71 = arith.constant 7.812500e-03 : f32
    %215 = vector.broadcast %cst_71 : f32 to vector<1x8xf32>
    %216 = arith.mulf %214, %215 : vector<1x8xf32>
    %217 = tpu.concatenate %216, %216, %216, %216, %216, %216, %216, %216 in 1 : vector<1x8xf32>, vector<1x8xf32>, vector<1x8xf32>, vector<1x8xf32>, vector<1x8xf32>, vector<1x8xf32>, vector<1x8xf32>, vector<1x8xf32> -> vector<1x64xf32>
    %218 = vector.broadcast %217 : vector<1x64xf32> to vector<16x64xf32>
    %219 = arith.subf %195, %218 : vector<16x64xf32>
    %220 = arith.mulf %219, %219 : vector<16x64xf32>
    %cst_72 = arith.constant dense<0.000000e+00> : vector<64xf32>
    %221 = vector.multi_reduction <add>, %220, %cst_72 [0] : vector<16x64xf32> to vector<64xf32>
    %222 = vector.shape_cast %221 : vector<64xf32> to vector<1x64xf32>
    %223 = vector.extract_strided_slice %222 {offsets = [0, 0], sizes = [1, 8], strides = [1, 1]} : vector<1x64xf32> to vector<1x8xf32>
    %224 = vector.extract_strided_slice %222 {offsets = [0, 8], sizes = [1, 8], strides = [1, 1]} : vector<1x64xf32> to vector<1x8xf32>
    %225 = arith.addf %223, %224 : vector<1x8xf32>
    %226 = vector.extract_strided_slice %222 {offsets = [0, 16], sizes = [1, 8], strides = [1, 1]} : vector<1x64xf32> to vector<1x8xf32>
    %227 = arith.addf %225, %226 : vector<1x8xf32>
    %228 = vector.extract_strided_slice %222 {offsets = [0, 24], sizes = [1, 8], strides = [1, 1]} : vector<1x64xf32> to vector<1x8xf32>
    %229 = arith.addf %227, %228 : vector<1x8xf32>
    %230 = vector.extract_strided_slice %222 {offsets = [0, 32], sizes = [1, 8], strides = [1, 1]} : vector<1x64xf32> to vector<1x8xf32>
    %231 = arith.addf %229, %230 : vector<1x8xf32>
    %232 = vector.extract_strided_slice %222 {offsets = [0, 40], sizes = [1, 8], strides = [1, 1]} : vector<1x64xf32> to vector<1x8xf32>
    %233 = arith.addf %231, %232 : vector<1x8xf32>
    %234 = vector.extract_strided_slice %222 {offsets = [0, 48], sizes = [1, 8], strides = [1, 1]} : vector<1x64xf32> to vector<1x8xf32>
    %235 = arith.addf %233, %234 : vector<1x8xf32>
    %236 = vector.extract_strided_slice %222 {offsets = [0, 56], sizes = [1, 8], strides = [1, 1]} : vector<1x64xf32> to vector<1x8xf32>
    %237 = arith.addf %235, %236 : vector<1x8xf32>
    %cst_73 = arith.constant 7.812500e-03 : f32
    %238 = vector.broadcast %cst_73 : f32 to vector<1x8xf32>
    %239 = arith.mulf %237, %238 : vector<1x8xf32>
    %cst_74 = arith.constant 9.99999974E-6 : f32
    %240 = vector.broadcast %cst_74 : f32 to vector<1x8xf32>
    %241 = arith.addf %239, %240 : vector<1x8xf32>
    %242 = math.rsqrt %241 : vector<1x8xf32>
    %243 = tpu.concatenate %242, %242, %242, %242, %242, %242, %242, %242 in 1 : vector<1x8xf32>, vector<1x8xf32>, vector<1x8xf32>, vector<1x8xf32>, vector<1x8xf32>, vector<1x8xf32>, vector<1x8xf32>, vector<1x8xf32> -> vector<1x64xf32>
    %244 = vector.broadcast %243 : vector<1x64xf32> to vector<16x64xf32>
    %245 = arith.mulf %219, %244 : vector<16x64xf32>
    %246 = vector.broadcast %196 : vector<1x64xf32> to vector<16x64xf32>
    %247 = arith.mulf %245, %246 : vector<16x64xf32>
    %248 = vector.broadcast %197 : vector<1x64xf32> to vector<16x64xf32>
    %249 = arith.addf %247, %248 : vector<16x64xf32>
    %cst_75 = arith.constant 0.000000e+00 : f32
    %250 = vector.broadcast %cst_75 : f32 to vector<16x64xf32>
    %251 = arith.maximumf %249, %250 : vector<16x64xf32>
    %c0_76 = arith.constant 0 : index
    %c0_77 = arith.constant 0 : index
    %252 = vector.load %arg5[%c0_76, %c0_77] : memref<16x64xf32, #tpu.memory_space<vmem>>, vector<16x64xf32>
    tpu.vector_store %arg5[%c0_76, %c0_77], %251 {strides = array<i32>} : memref<16x64xf32, #tpu.memory_space<vmem>>, vector<16x64xf32>,
    return
  }
  func.func @transform_0(%arg0: i32) -> (i32, i32, i32) {
    %c0_i32 = arith.constant 0 : i32
    %c0_i32_0 = arith.constant 0 : i32
    %c0_i32_1 = arith.constant 0 : i32
    %c0_i32_2 = arith.constant 0 : i32
    return %c0_i32, %c0_i32_0, %c0_i32_1 : i32, i32, i32
  }
  func.func @transform_1(%arg0: i32) -> (i32, i32, i32) {
    %c0_i32 = arith.constant 0 : i32
    %c0_i32_0 = arith.constant 0 : i32
    %c0_i32_1 = arith.constant 0 : i32
    %c0_i32_2 = arith.constant 0 : i32
    return %c0_i32, %c0_i32_0, %c0_i32_1 : i32, i32, i32
  }
  func.func @transform_2(%arg0: i32) -> (i32, i32, i32) {
    %c0_i32 = arith.constant 0 : i32
    %c0_i32_0 = arith.constant 0 : i32
    %c0_i32_1 = arith.constant 0 : i32
    %c0_i32_2 = arith.constant 0 : i32
    return %c0_i32, %c0_i32_0, %c0_i32_1 : i32, i32, i32
  }
  func.func @transform_3(%arg0: i32) -> (i32, i32) {
    %c0_i32 = arith.constant 0 : i32
    %c0_i32_0 = arith.constant 0 : i32
    %c0_i32_1 = arith.constant 0 : i32
    return %c0_i32, %c0_i32_0 : i32, i32
  }
  func.func @transform_4(%arg0: i32) -> (i32, i32) {
    %c0_i32 = arith.constant 0 : i32
    %c0_i32_0 = arith.constant 0 : i32
    %c0_i32_1 = arith.constant 0 : i32
    return %c0_i32, %c0_i32_0 : i32, i32
  }
}

</mosaic_0001>

<llo_original>
// kernel: down_forward.1
$region0: #{down_forward.1}
  #allocation0 [shape = 'u32[]', space=smem, size = 0x4, offset = 0x4, fixed_abs, tag = 'smem constant byte address 0x4 - core index']
  #allocation1 [shape = 'u32[72,128]{1,0:T(1,128)}', space=vmem, size = 0x9000, scoped, tag = 'internal scratch']
  %s0 = inlined_call_operand.vmem [shape: bf16[4,16,32], index: 0, kind: input, shape index: {}]
  %s1 = inlined_call_operand.vmem [shape: bf16[3,32,64], index: 1, kind: input, shape index: {}]
  %s2 = inlined_call_operand.vmem [shape: bf16[3,64,64], index: 2, kind: input, shape index: {}]
  %s3 = inlined_call_operand.vmem [shape: f32[4,64], index: 3, kind: input, shape index: {}]
  %s4 = inlined_call_operand.vmem [shape: f32[16,64], index: 4, kind: output, shape index: {}]
  %s5 = sld [smem:[#allocation0]]
  $region26: #{down_forward.1} parent=0
    _
  %s7 = ssub.s32 1, %s5
  %s8 = scalar_select 0, %s7, %s5
  // Predicated region
  $region2: #{down_forward.1} parent=0 // pred_check
    _
  $region3: #{down_forward.1} parent=0 // pred_check_branch
    %10 = sbr.rel (0) target = $region5
  $region4: #{down_forward.1} parent=0 // pred_region
    _
  $region5: #{down_forward.1} parent=0 // pred_fallthru
    _
  // Predicated region
  $region6: #{down_forward.1} parent=0 // pred_check
    _
  $region7: #{down_forward.1} parent=0 // pred_check_branch
    %12 = sbr.rel (0) target = $region9
  $region8: #{down_forward.1} parent=0 // pred_region
    _
  $region9: #{down_forward.1} parent=0 // pred_fallthru
    _
  // Predicated region
  $region10: #{down_forward.1} parent=0 // pred_check
    _
  $region11: #{down_forward.1} parent=0 // pred_check_branch
    %14 = sbr.rel (0) target = $region13
  $region12: #{down_forward.1} parent=0 // pred_region
    _
  $region13: #{down_forward.1} parent=0 // pred_fallthru
    _
  // Predicated region
  $region14: #{down_forward.1} parent=0 // pred_check
    _
  $region15: #{down_forward.1} parent=0 // pred_check_branch
    %16 = sbr.rel (0) target = $region17
  $region16: #{down_forward.1} parent=0 // pred_region
    _
  $region17: #{down_forward.1} parent=0 // pred_fallthru
    _
  %v20 = vld [vmem:[%s0] sm:$0xf]
  %v21 = vld [vmem:[%s0 + $0x4] sm:$0xf]
  %v22 = vld [vmem:[%s0 + $0x8] sm:$0xf]
  %v23 = vld [vmem:[%s0 + $0xc] sm:$0xf]
  %v24 = vld [vmem:[%s0 + $0x10] sm:$0xf]
  %v25 = vld [vmem:[%s0 + $0x14] sm:$0xf]
  %v26 = vld [vmem:[%s0 + $0x18] sm:$0xf]
  %v27 = vld [vmem:[%s0 + $0x1c] sm:$0xf]
  %v28 = vunpack.c.l.bf16 %v20
  %v29 = vunpack.c.l.bf16 %v21
  %v30 = vunpack.c.l.bf16 %v22
  %v31 = vunpack.c.l.bf16 %v23
  %v32 = vmax.f32 %v28, %v30
  %v33 = vmax.f32 %v29, %v31
  %v34 = vpack.c.bf16 %v32, %v32
  %v35 = vpack.c.bf16 %v33, %v33
  %v36 = vunpack.c.l.bf16 %v24
  %v37 = vunpack.c.l.bf16 %v25
  %v38 = vunpack.c.l.bf16 %v26
  %v39 = vunpack.c.l.bf16 %v27
  %v40 = vmax.f32 %v36, %v38
  %v41 = vmax.f32 %v37, %v39
  %v42 = vpack.c.bf16 %v40, %v40
  %v43 = vpack.c.bf16 %v41, %v41
  %v44 = vunpack.c.l.bf16 %v34
  %v45 = vunpack.c.l.bf16 %v35
  %v46 = vunpack.c.l.bf16 %v42
  %v47 = vunpack.c.l.bf16 %v43
  %v48 = vmax.f32 %v44, %v46
  %v49 = vmax.f32 %v45, %v47
  %v50 = vpack.c.bf16 %v48, %v48
  %v51 = vpack.c.bf16 %v49, %v49
  %v52 = vlaneseq
  %v53 = vshrl.u32 %v52, 7
  %v54 = vadd.s32 %v53, 8
  %vm55 = vcmp.lt.s32.totalorder %v53, 0
  %v56 = vsub.s32 0, %v53
  %v57 = vsel %vm55, %v56, %v53
  %v58 = vshrl.u32 %v57, 3
  %v59 = vand.u32 %v57, 7
  %v60 = vsub.s32 0, %v59
  %v61 = vsel %vm55, %v60, %v59
  %vm62 = vcmp.lt.s32.totalorder %v54, 0
  %v63 = vsub.s32 0, %v54
  %v64 = vsel %vm62, %v63, %v54
  %v65 = vshrl.u32 %v64, 3
  %v66 = vand.u32 %v64, 7
  %v67 = vsub.s32 0, %v66
  %v68 = vsel %vm62, %v67, %v66
  %vm69 = vcmp.ne.s32.totalorder %v61, 0
  %vm70 = vcmp.ne.s32.totalorder %v68, 0
  %vm71 = vcmp.lt.s32.totalorder %v61, 0
  %vm72 = vcmp.lt.s32.totalorder %v68, 0
  %vm73 = vmand %vm71, %vm69
  %vm74 = vmand %vm72, %vm70
  %v75 = vadd.s32 %v61, 8
  %v76 = vadd.s32 %v68, 8
  %v77 = vsel %vm73, %v75, %v61
  %v78 = vsel %vm74, %v76, %v68
  %v81 = vunpack.c.l.b16 %v50
  %v82 = vunpack.c.l.b16 %v51
  %v83 = vpack.c.b16 %v82, %v81
  %v85 = vshrl.u32 %v83, 16
  %v87 = vrot.slane %v85, 7
  %v88 = vshll.u32 %v83, 16
  %v90 = vor.u32 %v87, %v88
  %vm92 = vcmask 1040384
  %vm93 = vsmask.f32 256
  %vm94 = vmand %vm92, %vm93
  %v95 = vsel %vm94, 0, %v90
  %v96 = vadd.s32 %v77, 4294967295
  %v97 = vadd.s32 %v78, 4294967295
  %vm98 = vcmp.ge.s32.totalorder %v96, 0
  %vm99 = vcmp.ge.s32.totalorder %v97, 0
  %vm100 = vcmp.lt.s32.totalorder %v96, 8
  %vm101 = vcmp.lt.s32.totalorder %v97, 8
  %vm102 = vmand %vm98, %vm100
  %vm103 = vmand %vm99, %vm101
  %v104 = vsel %vm102, 1, 0
  %v105 = vsel %vm103, 1, 0
  %vm106 = vcmp.eq.s32.totalorder %v104, 1
  %vm107 = vcmp.eq.s32.totalorder %v105, 1
  %vm108 = vmpackc.low %vm106, %vm106
  %vm109 = vmpackc.low %vm107, %vm107
  %v110 = vsel %vm108, 65537, 0
  %v111 = vsel %vm109, 65537, 0
  %v112 = vunpack.c.l.b16 %v110
  %v113 = vunpack.c.l.b16 %v111
  %v114 = vpack.c.b16 %v113, %v112
  %v115 = vunpack.c.l.b16 %v114
  %v116 = vunpack.c.h.b16 %v114
  %v117 = vunpack.c.l.b16 0
  %v118 = vunpack.c.h.b16 0
  %vm119 = vcmp.ne.s32.totalorder %v115, %v117
  %vm120 = vcmp.ne.s32.totalorder %v116, %v118
  %vm121 = vmpackc.low %vm120, %vm119
  %v122 = vsel %vm121, %v95, 0
  %v123 = vld [vmem:[%s1] sm:$0xf]
  %v124 = vld [vmem:[%s1 + $0x4] sm:$0xf]
  %v125 = vld [vmem:[%s1 + $0x8] sm:$0xf]
  %v126 = vld [vmem:[%s1 + $0xc] sm:$0xf]
  %vm127 = vcmp.ge.s32.totalorder %v77, 0
  %vm128 = vcmp.ge.s32.totalorder %v78, 0
  %vm129 = vcmp.lt.s32.totalorder %v77, 8
  %vm130 = vcmp.lt.s32.totalorder %v78, 8
  %vm131 = vmand %vm127, %vm129
  %vm132 = vmand %vm128, %vm130
  %v133 = vsel %vm131, 1, 0
  %v134 = vsel %vm132, 1, 0
  %vm135 = vcmp.eq.s32.totalorder %v133, 1
  %vm136 = vcmp.eq.s32.totalorder %v134, 1
  %vm137 = vmpackc.low %vm135, %vm135
  %vm138 = vmpackc.low %vm136, %vm136
  %v139 = vsel %vm137, %v50, 0
  %v140 = vsel %vm138, %v51, 0
  %s141 = scalar_lea.vmem %s1, 16
  %v142 = vld [vmem:[%s141] sm:$0xf]
  %v143 = vld [vmem:[%s141 + $0x4] sm:$0xf]
  %v144 = vld [vmem:[%s141 + $0x8] sm:$0xf]
  %v145 = vld [vmem:[%s141 + $0xc] sm:$0xf]
  %v148 = vunpack.c.l.b16 %v139
  %v149 = vunpack.c.l.b16 %v140
  %v150 = vpack.c.b16 %v149, %v148
  %v155 = vunpack.c.l.b16 %v142
  %v156 = vunpack.c.l.b16 %v143
  %v157 = vunpack.c.l.b16 %v144
  %v158 = vunpack.c.l.b16 %v145
  %v159 = vpack.c.b16 %v156, %v155
  %v160 = vpack.c.b16 %v158, %v157
  %vm163 = vcmask 261120
  %v165 = vsel %vm163, %v150, 0
  %167 = vmatpush.bf16.msra.mxu0 0
  %168 = vmatpush.bf16.msra.mxu0 0
  %169 = vmatpush.bf16.msra.mxu0 0
  %170 = vmatpush.bf16.msra.mxu0 0
  %171 = vmatpush.bf16.msra.mxu0 0
  %172 = vmatpush.bf16.msra.mxu0 0
  %173 = vmatpush.bf16.msra.mxu0 %v160
  %174 = vmatpush.bf16.msra.mxu0 %v159
  %175 = vmatmul.bf16.gmra.mxu0 %v165
  %v176 = vpop.f32.mrf.mxu0
  %v177 = vadd.f32 0.0, %v176
  %v178 = vpop.f32.mrf.mxu0
  %v179 = vadd.f32 0.0, %v178
  %180 = vdwg.mxu0
  %v185 = vunpack.c.l.b16 %v123
  %v186 = vunpack.c.l.b16 %v124
  %v187 = vunpack.c.l.b16 %v125
  %v188 = vunpack.c.l.b16 %v126
  %v189 = vpack.c.b16 %v186, %v185
  %v190 = vpack.c.b16 %v188, %v187
  %v194 = vsel %vm163, %v122, 0
  %196 = vmatpush.bf16.msra.mxu0 0
  %197 = vmatpush.bf16.msra.mxu0 0
  %198 = vmatpush.bf16.msra.mxu0 0
  %199 = vmatpush.bf16.msra.mxu0 0
  %200 = vmatpush.bf16.msra.mxu0 0
  %201 = vmatpush.bf16.msra.mxu0 0
  %202 = vmatpush.bf16.msra.mxu0 %v190
  %203 = vmatpush.bf16.msra.mxu0 %v189
  %204 = vmatmul.bf16.gmra.mxu0 %v194
  %v205 = vpop.f32.mrf.mxu0
  %v206 = vadd.f32 %v177, %v205
  %v207 = vpop.f32.mrf.mxu0
  %v208 = vadd.f32 %v179, %v207
  %209 = vdwg.mxu0
  %v210 = vrot.slane %v88, 1
  %v211 = vor.u32 %v85, %v210
  %vm213 = vcmask 1047552
  %vm214 = vsmask.f32 7424
  %vm215 = vmand %vm213, %vm214
  %v216 = vsel %vm215, %v211, 0
  %v217 = vadd.s32 %v77, 1
  %v218 = vadd.s32 %v78, 1
  %vm219 = vcmp.ge.s32.totalorder %v217, 0
  %vm220 = vcmp.ge.s32.totalorder %v218, 0
  %vm221 = vcmp.lt.s32.totalorder %v217, 8
  %vm222 = vcmp.lt.s32.totalorder %v218, 8
  %vm223 = vmand %vm219, %vm221
  %vm224 = vmand %vm220, %vm222
  %v225 = vsel %vm223, 1, 0
  %v226 = vsel %vm224, 1, 0
  %vm227 = vcmp.eq.s32.totalorder %v225, 1
  %vm228 = vcmp.eq.s32.totalorder %v226, 1
  %vm229 = vmpackc.low %vm227, %vm227
  %vm230 = vmpackc.low %vm228, %vm228
  %v231 = vsel %vm229, 65537, 0
  %v232 = vsel %vm230, 65537, 0
  %v233 = vunpack.c.l.b16 %v231
  %v234 = vunpack.c.l.b16 %v232
  %v235 = vpack.c.b16 %v234, %v233
  %v236 = vunpack.c.l.b16 %v235
  %v237 = vunpack.c.h.b16 %v235
  %v238 = vunpack.c.l.b16 0
  %v239 = vunpack.c.h.b16 0
  %vm240 = vcmp.ne.s32.totalorder %v236, %v238
  %vm241 = vcmp.ne.s32.totalorder %v237, %v239
  %vm242 = vmpackc.low %vm241, %vm240
  %v243 = vsel %vm242, %v216, 0
  %s244 = scalar_lea.vmem %s1, 32
  %v245 = vld [vmem:[%s244] sm:$0xf]
  %v246 = vld [vmem:[%s244 + $0x4] sm:$0xf]
  %v247 = vld [vmem:[%s244 + $0x8] sm:$0xf]
  %v248 = vld [vmem:[%s244 + $0xc] sm:$0xf]
  %v253 = vunpack.c.l.b16 %v245
  %v254 = vunpack.c.l.b16 %v246
  %v255 = vunpack.c.l.b16 %v247
  %v256 = vunpack.c.l.b16 %v248
  %v257 = vpack.c.b16 %v254, %v253
  %v258 = vpack.c.b16 %v256, %v255
  %v262 = vsel %vm163, %v243, 0
  %264 = vmatpush.bf16.msra.mxu0 0
  %265 = vmatpush.bf16.msra.mxu0 0
  %266 = vmatpush.bf16.msra.mxu0 0
  %267 = vmatpush.bf16.msra.mxu0 0
  %268 = vmatpush.bf16.msra.mxu0 0
  %269 = vmatpush.bf16.msra.mxu0 0
  %270 = vmatpush.bf16.msra.mxu0 %v258
  %271 = vmatpush.bf16.msra.mxu0 %v257
  %272 = vmatmul.bf16.gmra.mxu0 %v262
  %v273 = vpop.f32.mrf.mxu0
  %v274 = vadd.f32 0.0, %v273
  %v275 = vpop.f32.mrf.mxu0
  %v276 = vadd.f32 0.0, %v275
  %277 = vdwg.mxu0
  %v278 = vadd.f32 %v206, %v274
  %v279 = vadd.f32 %v208, %v276
  %v280 = vld [vmem:[%s3] sm:$0x1]
  %v281 = vld [vmem:[%s3 + $0x1] sm:$0x1]
  %vm282 = vcmask 523264
  %v283 = vsel %vm282, %v278, 0.0
  %v284 = vsel %vm282, %v279, 0.0
  %v285 = vadd.f32 %v283, %v284
  %v286 = vrot.slane %v285, 4
  %v287 = vadd.f32 %v285, %v286
  %v288 = vrot.slane %v287, 2
  %v289 = vadd.f32 %v287, %v288
  %v290 = vrot.slane %v289, 1
  %v291 = vadd.f32 %v289, %v290
  %293 = vrot.lane.b32.xlu0 %v291, 120
  %v294 = vpop.permute.xlu0 %293
  %v296 = vadd.f32 %v291, %v294
  %297 = vrot.lane.b32.xlu0 %v291, 112
  %v298 = vpop.permute.xlu0 %297
  %v300 = vadd.f32 %v296, %v298
  %301 = vrot.lane.b32.xlu0 %v291, 104
  %v302 = vpop.permute.xlu0 %301
  %v304 = vadd.f32 %v300, %v302
  %305 = vrot.lane.b32.xlu0 %v291, 96
  %v306 = vpop.permute.xlu0 %305
  %v308 = vadd.f32 %v304, %v306
  %309 = vrot.lane.b32.xlu0 %v291, 88
  %v310 = vpop.permute.xlu0 %309
  %v312 = vadd.f32 %v308, %v310
  %313 = vrot.lane.b32.xlu0 %v291, 80
  %v314 = vpop.permute.xlu0 %313
  %v316 = vadd.f32 %v312, %v314
  %317 = vrot.lane.b32.xlu0 %v291, 72
  %v318 = vpop.permute.xlu0 %317
  %v320 = vadd.f32 %v316, %v318
  %v321 = vmul.f32 %v320, 0.0078125
  %323 = vrot.lane.b32.xlu0 %v321, 8
  %v324 = vpop.permute.xlu0 %323
  %326 = vrot.lane.b32.xlu0 %v321, 16
  %v327 = vpop.permute.xlu0 %326
  %329 = vrot.lane.b32.xlu0 %v321, 24
  %v330 = vpop.permute.xlu0 %329
  %332 = vrot.lane.b32.xlu0 %v321, 32
  %v333 = vpop.permute.xlu0 %332
  %335 = vrot.lane.b32.xlu0 %v321, 40
  %v336 = vpop.permute.xlu0 %335
  %338 = vrot.lane.b32.xlu0 %v321, 48
  %v339 = vpop.permute.xlu0 %338
  %341 = vrot.lane.b32.xlu0 %v321, 56
  %v342 = vpop.permute.xlu0 %341
  %vm344 = vcmask 64512
  %v345 = vsel %vm344, %v321, %v324
  %vm346 = vcmask 130048
  %v347 = vsel %vm346, %v345, %v327
  %vm348 = vcmask 195584
  %v349 = vsel %vm348, %v347, %v330
  %v350 = vsel %vm163, %v349, %v333
  %vm351 = vcmask 326656
  %v352 = vsel %vm351, %v350, %v336
  %vm353 = vcmask 392192
  %v354 = vsel %vm353, %v352, %v339
  %vm355 = vcmask 457728
  %v356 = vsel %vm355, %v354, %v342
  %v357 = vperm.slane %v356, 0
  %v358 = vsub.f32 %v278, %v357
  %v359 = vsub.f32 %v279, %v357
  %v360 = vmul.f32 %v358, %v358
  %v361 = vmul.f32 %v359, %v359
  %v362 = vsel %vm282, %v360, 0.0
  %v363 = vsel %vm282, %v361, 0.0
  %v364 = vadd.f32 %v362, %v363
  %v365 = vrot.slane %v364, 4
  %v366 = vadd.f32 %v364, %v365
  %v367 = vrot.slane %v366, 2
  %v368 = vadd.f32 %v366, %v367
  %v369 = vrot.slane %v368, 1
  %v370 = vadd.f32 %v368, %v369
  %372 = vrot.lane.b32.xlu0 %v370, 120
  %v373 = vpop.permute.xlu0 %372
  %v375 = vadd.f32 %v370, %v373
  %376 = vrot.lane.b32.xlu0 %v370, 112
  %v377 = vpop.permute.xlu0 %376
  %v379 = vadd.f32 %v375, %v377
  %380 = vrot.lane.b32.xlu0 %v370, 104
  %v381 = vpop.permute.xlu0 %380
  %v383 = vadd.f32 %v379, %v381
  %384 = vrot.lane.b32.xlu0 %v370, 96
  %v385 = vpop.permute.xlu0 %384
  %v387 = vadd.f32 %v383, %v385
  %388 = vrot.lane.b32.xlu0 %v370, 88
  %v389 = vpop.permute.xlu0 %388
  %v391 = vadd.f32 %v387, %v389
  %392 = vrot.lane.b32.xlu0 %v370, 80
  %v393 = vpop.permute.xlu0 %392
  %v395 = vadd.f32 %v391, %v393
  %396 = vrot.lane.b32.xlu0 %v370, 72
  %v397 = vpop.permute.xlu0 %396
  %v399 = vadd.f32 %v395, %v397
  %v400 = vmul.f32 %v399, 0.0078125
  %v401 = vadd.f32 %v400, 1e-05
  %v402 = vrsqrt.pop %v401
  %v403 = vmul.f32 %v402, %v401
  %v404 = vmul.f32 %v403, %v402
  %v405 = vmul.f32 0.5, %v404
  %v406 = vsub.f32 1.5, %v405
  %v407 = vmul.f32 %v402, %v406
  %vm408 = vweird.f32 %v401
  %vm409 = vweird.f32 %v402
  %vm410 = vmor %vm408, %vm409
  %v411 = vsel %vm410, %v402, %v407
  %413 = vrot.lane.b32.xlu0 %v411, 8
  %v414 = vpop.permute.xlu0 %413
  %416 = vrot.lane.b32.xlu0 %v411, 16
  %v417 = vpop.permute.xlu0 %416
  %419 = vrot.lane.b32.xlu0 %v411, 24
  %v420 = vpop.permute.xlu0 %419
  %422 = vrot.lane.b32.xlu0 %v411, 32
  %v423 = vpop.permute.xlu0 %422
  %425 = vrot.lane.b32.xlu0 %v411, 40
  %v426 = vpop.permute.xlu0 %425
  %428 = vrot.lane.b32.xlu0 %v411, 48
  %v429 = vpop.permute.xlu0 %428
  %431 = vrot.lane.b32.xlu0 %v411, 56
  %v432 = vpop.permute.xlu0 %431
  %v434 = vsel %vm344, %v411, %v414
  %v435 = vsel %vm346, %v434, %v417
  %v436 = vsel %vm348, %v435, %v420
  %v437 = vsel %vm163, %v436, %v423
  %v438 = vsel %vm351, %v437, %v426
  %v439 = vsel %vm353, %v438, %v429
  %v440 = vsel %vm355, %v439, %v432
  %v441 = vperm.slane %v440, 0
  %v442 = vmul.f32 %v358, %v441
  %v443 = vmul.f32 %v359, %v441
  %v444 = vperm.slane %v280, 0
  %v445 = vmul.f32 %v442, %v444
  %v446 = vmul.f32 %v443, %v444
  %v447 = vperm.slane %v281, 0
  %v448 = vadd.f32 %v445, %v447
  %v449 = vadd.f32 %v446, %v447
  %v450 = vmax.f32 %v448, 0.0
  %v451 = vmax.f32 %v449, 0.0
  %v452 = vpack.c.bf16 %v450, %v450
  %v453 = vpack.c.bf16 %v451, %v451
  %v456 = vunpack.c.l.b16 %v452
  %v457 = vunpack.c.l.b16 %v453
  %v458 = vpack.c.b16 %v457, %v456
  %v460 = vshrl.u32 %v458, 16
  %v462 = vrot.slane %v460, 7
  %v463 = vshll.u32 %v458, 16
  %v465 = vor.u32 %v462, %v463
  %v467 = vsel %vm94, 0, %v465
  %v468 = vsel %vm121, %v467, 0
  %v469 = vld [vmem:[%s2] sm:$0xf]
  %v470 = vld [vmem:[%s2 + $0x4] sm:$0xf]
  %v471 = vld [vmem:[%s2 + $0x8] sm:$0xf]
  %v472 = vld [vmem:[%s2 + $0xc] sm:$0xf]
  %v473 = vld [vmem:[%s2 + $0x10] sm:$0xf]
  %v474 = vld [vmem:[%s2 + $0x14] sm:$0xf]
  %v475 = vld [vmem:[%s2 + $0x18] sm:$0xf]
  %v476 = vld [vmem:[%s2 + $0x1c] sm:$0xf]
  %v477 = vsel %vm137, %v452, 0
  %v478 = vsel %vm138, %v453, 0
  %s479 = scalar_lea.vmem %s2, 32
  %v480 = vld [vmem:[%s479] sm:$0xf]
  %v481 = vld [vmem:[%s479 + $0x4] sm:$0xf]
  %v482 = vld [vmem:[%s479 + $0x8] sm:$0xf]
  %v483 = vld [vmem:[%s479 + $0xc] sm:$0xf]
  %v484 = vld [vmem:[%s479 + $0x10] sm:$0xf]
  %v485 = vld [vmem:[%s479 + $0x14] sm:$0xf]
  %v486 = vld [vmem:[%s479 + $0x18] sm:$0xf]
  %v487 = vld [vmem:[%s479 + $0x1c] sm:$0xf]
  %v490 = vunpack.c.l.b16 %v477
  %v491 = vunpack.c.l.b16 %v478
  %v492 = vpack.c.b16 %v491, %v490
  %v501 = vunpack.c.l.b16 %v480
  %v502 = vunpack.c.l.b16 %v481
  %v503 = vunpack.c.l.b16 %v482
  %v504 = vunpack.c.l.b16 %v483
  %v505 = vunpack.c.l.b16 %v484
  %v506 = vunpack.c.l.b16 %v485
  %v507 = vunpack.c.l.b16 %v486
  %v508 = vunpack.c.l.b16 %v487
  %v509 = vpack.c.b16 %v502, %v501
  %v510 = vpack.c.b16 %v504, %v503
  %v511 = vpack.c.b16 %v506, %v505
  %v512 = vpack.c.b16 %v508, %v507
  %v518 = vsel %vm282, %v492, 0
  %520 = vmatpush.bf16.msra.mxu0 0
  %521 = vmatpush.bf16.msra.mxu0 0
  %522 = vmatpush.bf16.msra.mxu0 0
  %523 = vmatpush.bf16.msra.mxu0 0
  %524 = vmatpush.bf16.msra.mxu0 %v512
  %525 = vmatpush.bf16.msra.mxu0 %v511
  %526 = vmatpush.bf16.msra.mxu0 %v510
  %527 = vmatpush.bf16.msra.mxu0 %v509
  %528 = vmatmul.bf16.gmra.mxu0 %v518
  %v529 = vpop.f32.mrf.mxu0
  %v530 = vadd.f32 0.0, %v529
  %v531 = vpop.f32.mrf.mxu0
  %v532 = vadd.f32 0.0, %v531
  %533 = vdwg.mxu0
  %v542 = vunpack.c.l.b16 %v469
  %v543 = vunpack.c.l.b16 %v470
  %v544 = vunpack.c.l.b16 %v471
  %v545 = vunpack.c.l.b16 %v472
  %v546 = vunpack.c.l.b16 %v473
  %v547 = vunpack.c.l.b16 %v474
  %v548 = vunpack.c.l.b16 %v475
  %v549 = vunpack.c.l.b16 %v476
  %v550 = vpack.c.b16 %v543, %v542
  %v551 = vpack.c.b16 %v545, %v544
  %v552 = vpack.c.b16 %v547, %v546
  %v553 = vpack.c.b16 %v549, %v548
  %v559 = vsel %vm282, %v468, 0
  %561 = vmatpush.bf16.msra.mxu0 0
  %562 = vmatpush.bf16.msra.mxu0 0
  %563 = vmatpush.bf16.msra.mxu0 0
  %564 = vmatpush.bf16.msra.mxu0 0
  %565 = vmatpush.bf16.msra.mxu0 %v553
  %566 = vmatpush.bf16.msra.mxu0 %v552
  %567 = vmatpush.bf16.msra.mxu0 %v551
  %568 = vmatpush.bf16.msra.mxu0 %v550
  %569 = vmatmul.bf16.gmra.mxu0 %v559
  %v570 = vpop.f32.mrf.mxu0
  %v571 = vadd.f32 %v530, %v570
  %v572 = vpop.f32.mrf.mxu0
  %v573 = vadd.f32 %v532, %v572
  %574 = vdwg.mxu0
  %v575 = vrot.slane %v463, 1
  %v576 = vor.u32 %v460, %v575
  %v578 = vsel %vm215, %v576, 0
  %v579 = vsel %vm242, %v578, 0
  %s580 = scalar_lea.vmem %s2, 64
  %v581 = vld [vmem:[%s580] sm:$0xf]
  %v582 = vld [vmem:[%s580 + $0x4] sm:$0xf]
  %v583 = vld [vmem:[%s580 + $0x8] sm:$0xf]
  %v584 = vld [vmem:[%s580 + $0xc] sm:$0xf]
  %v585 = vld [vmem:[%s580 + $0x10] sm:$0xf]
  %v586 = vld [vmem:[%s580 + $0x14] sm:$0xf]
  %v587 = vld [vmem:[%s580 + $0x18] sm:$0xf]
  %v588 = vld [vmem:[%s580 + $0x1c] sm:$0xf]
  %v597 = vunpack.c.l.b16 %v581
  %v598 = vunpack.c.l.b16 %v582
  %v599 = vunpack.c.l.b16 %v583
  %v600 = vunpack.c.l.b16 %v584
  %v601 = vunpack.c.l.b16 %v585
  %v602 = vunpack.c.l.b16 %v586
  %v603 = vunpack.c.l.b16 %v587
  %v604 = vunpack.c.l.b16 %v588
  %v605 = vpack.c.b16 %v598, %v597
  %v606 = vpack.c.b16 %v600, %v599
  %v607 = vpack.c.b16 %v602, %v601
  %v608 = vpack.c.b16 %v604, %v603
  %v614 = vsel %vm282, %v579, 0
  %616 = vmatpush.bf16.msra.mxu0 0
  %617 = vmatpush.bf16.msra.mxu0 0
  %618 = vmatpush.bf16.msra.mxu0 0
  %619 = vmatpush.bf16.msra.mxu0 0
  %620 = vmatpush.bf16.msra.mxu0 %v608
  %621 = vmatpush.bf16.msra.mxu0 %v607
  %622 = vmatpush.bf16.msra.mxu0 %v606
  %623 = vmatpush.bf16.msra.mxu0 %v605
  %624 = vmatmul.bf16.gmra.mxu0 %v614
  %v625 = vpop.f32.mrf.mxu0
  %v626 = vadd.f32 0.0, %v625
  %v627 = vpop.f32.mrf.mxu0
  %v628 = vadd.f32 0.0, %v627
  %629 = vdwg.mxu0
  %v630 = vadd.f32 %v571, %v626
  %v631 = vadd.f32 %v573, %v628
  %v632 = vld [vmem:[%s3 + $0x2] sm:$0x1]
  %v633 = vld [vmem:[%s3 + $0x3] sm:$0x1]
  %v634 = vsel %vm282, %v630, 0.0
  %v635 = vsel %vm282, %v631, 0.0
  %v636 = vadd.f32 %v634, %v635
  %v637 = vrot.slane %v636, 4
  %v638 = vadd.f32 %v636, %v637
  %v639 = vrot.slane %v638, 2
  %v640 = vadd.f32 %v638, %v639
  %v641 = vrot.slane %v640, 1
  %v642 = vadd.f32 %v640, %v641
  %644 = vrot.lane.b32.xlu0 %v642, 120
  %v645 = vpop.permute.xlu0 %644
  %v647 = vadd.f32 %v642, %v645
  %648 = vrot.lane.b32.xlu0 %v642, 112
  %v649 = vpop.permute.xlu0 %648
  %v651 = vadd.f32 %v647, %v649
  %652 = vrot.lane.b32.xlu0 %v642, 104
  %v653 = vpop.permute.xlu0 %652
  %v655 = vadd.f32 %v651, %v653
  %656 = vrot.lane.b32.xlu0 %v642, 96
  %v657 = vpop.permute.xlu0 %656
  %v659 = vadd.f32 %v655, %v657
  %660 = vrot.lane.b32.xlu0 %v642, 88
  %v661 = vpop.permute.xlu0 %660
  %v663 = vadd.f32 %v659, %v661
  %664 = vrot.lane.b32.xlu0 %v642, 80
  %v665 = vpop.permute.xlu0 %664
  %v667 = vadd.f32 %v663, %v665
  %668 = vrot.lane.b32.xlu0 %v642, 72
  %v669 = vpop.permute.xlu0 %668
  %v671 = vadd.f32 %v667, %v669
  %v672 = vmul.f32 %v671, 0.0078125
  %674 = vrot.lane.b32.xlu0 %v672, 8
  %v675 = vpop.permute.xlu0 %674
  %677 = vrot.lane.b32.xlu0 %v672, 16
  %v678 = vpop.permute.xlu0 %677
  %680 = vrot.lane.b32.xlu0 %v672, 24
  %v681 = vpop.permute.xlu0 %680
  %683 = vrot.lane.b32.xlu0 %v672, 32
  %v684 = vpop.permute.xlu0 %683
  %686 = vrot.lane.b32.xlu0 %v672, 40
  %v687 = vpop.permute.xlu0 %686
  %689 = vrot.lane.b32.xlu0 %v672, 48
  %v690 = vpop.permute.xlu0 %689
  %692 = vrot.lane.b32.xlu0 %v672, 56
  %v693 = vpop.permute.xlu0 %692
  %v695 = vsel %vm344, %v672, %v675
  %v696 = vsel %vm346, %v695, %v678
  %v697 = vsel %vm348, %v696, %v681
  %v698 = vsel %vm163, %v697, %v684
  %v699 = vsel %vm351, %v698, %v687
  %v700 = vsel %vm353, %v699, %v690
  %v701 = vsel %vm355, %v700, %v693
  %v702 = vperm.slane %v701, 0
  %v703 = vsub.f32 %v630, %v702
  %v704 = vsub.f32 %v631, %v702
  %v705 = vmul.f32 %v703, %v703
  %v706 = vmul.f32 %v704, %v704
  %v707 = vsel %vm282, %v705, 0.0
  %v708 = vsel %vm282, %v706, 0.0
  %v709 = vadd.f32 %v707, %v708
  %v710 = vrot.slane %v709, 4
  %v711 = vadd.f32 %v709, %v710
  %v712 = vrot.slane %v711, 2
  %v713 = vadd.f32 %v711, %v712
  %v714 = vrot.slane %v713, 1
  %v715 = vadd.f32 %v713, %v714
  %717 = vrot.lane.b32.xlu0 %v715, 120
  %v718 = vpop.permute.xlu0 %717
  %v720 = vadd.f32 %v715, %v718
  %721 = vrot.lane.b32.xlu0 %v715, 112
  %v722 = vpop.permute.xlu0 %721
  %v724 = vadd.f32 %v720, %v722
  %725 = vrot.lane.b32.xlu0 %v715, 104
  %v726 = vpop.permute.xlu0 %725
  %v728 = vadd.f32 %v724, %v726
  %729 = vrot.lane.b32.xlu0 %v715, 96
  %v730 = vpop.permute.xlu0 %729
  %v732 = vadd.f32 %v728, %v730
  %733 = vrot.lane.b32.xlu0 %v715, 88
  %v734 = vpop.permute.xlu0 %733
  %v736 = vadd.f32 %v732, %v734
  %737 = vrot.lane.b32.xlu0 %v715, 80
  %v738 = vpop.permute.xlu0 %737
  %v740 = vadd.f32 %v736, %v738
  %741 = vrot.lane.b32.xlu0 %v715, 72
  %v742 = vpop.permute.xlu0 %741
  %v744 = vadd.f32 %v740, %v742
  %v745 = vmul.f32 %v744, 0.0078125
  %v746 = vadd.f32 %v745, 1e-05
  %v747 = vrsqrt.pop %v746
  %v748 = vmul.f32 %v747, %v746
  %v749 = vmul.f32 %v748, %v747
  %v750 = vmul.f32 0.5, %v749
  %v751 = vsub.f32 1.5, %v750
  %v752 = vmul.f32 %v747, %v751
  %vm753 = vweird.f32 %v746
  %vm754 = vweird.f32 %v747
  %vm755 = vmor %vm753, %vm754
  %v756 = vsel %vm755, %v747, %v752
  %758 = vrot.lane.b32.xlu0 %v756, 8
  %v759 = vpop.permute.xlu0 %758
  %761 = vrot.lane.b32.xlu0 %v756, 16
  %v762 = vpop.permute.xlu0 %761
  %764 = vrot.lane.b32.xlu0 %v756, 24
  %v765 = vpop.permute.xlu0 %764
  %767 = vrot.lane.b32.xlu0 %v756, 32
  %v768 = vpop.permute.xlu0 %767
  %770 = vrot.lane.b32.xlu0 %v756, 40
  %v771 = vpop.permute.xlu0 %770
  %773 = vrot.lane.b32.xlu0 %v756, 48
  %v774 = vpop.permute.xlu0 %773
  %776 = vrot.lane.b32.xlu0 %v756, 56
  %v777 = vpop.permute.xlu0 %776
  %v779 = vsel %vm344, %v756, %v759
  %v780 = vsel %vm346, %v779, %v762
  %v781 = vsel %vm348, %v780, %v765
  %v782 = vsel %vm163, %v781, %v768
  %v783 = vsel %vm351, %v782, %v771
  %v784 = vsel %vm353, %v783, %v774
  %v785 = vsel %vm355, %v784, %v777
  %v786 = vperm.slane %v785, 0
  %v787 = vmul.f32 %v703, %v786
  %v788 = vmul.f32 %v704, %v786
  %v789 = vperm.slane %v632, 0
  %v790 = vmul.f32 %v787, %v789
  %v791 = vmul.f32 %v788, %v789
  %v792 = vperm.slane %v633, 0
  %v793 = vadd.f32 %v790, %v792
  %v794 = vadd.f32 %v791, %v792
  %v795 = vmax.f32 %v793, 0.0
  %v796 = vmax.f32 %v794, 0.0
  %797 = vst.msk [vmem:[%s4] sm:$0xff] %vm282, %v795
  %798 = vst.msk [vmem:[%s4 + $0x8] sm:$0xff] %vm282, %v796
  // Predicated region
  $region18: #{down_forward.1} parent=0 // pred_check
    _
  $region19: #{down_forward.1} parent=0 // pred_check_branch
    %800 = sbr.rel (0) target = $region21
  $region20: #{down_forward.1} parent=0 // pred_region
    _
  $region21: #{down_forward.1} parent=0 // pred_fallthru
    _
  // Predicated region
  $region22: #{down_forward.1} parent=0 // pred_check
    _
  $region23: #{down_forward.1} parent=0 // pred_check_branch
    %802 = sbr.rel (0) target = $region25
  $region24: #{down_forward.1} parent=0 // pred_region
    _
  $region25: #{down_forward.1} parent=0 // pred_fallthru
    _

</llo_original>
